<compile_context>
chip_gen: v7x
topology: tpu7x:2x2x1
jax: 0.10.0
libtpu: 0.0.40
codegen_flags: <defaults>
</compile_context>

<pallas_src>
import functools

import jax
import jax.numpy as jnp
from jax import lax
from jax.experimental import pallas as pl
from jax.experimental.pallas import tpu as pltpu


def _round_up(x, m):
    return (x + m - 1) // m * m


def _cdiv(a, b):
    return (a + b - 1) // b


def _is_v5e():
    """Best-effort detection of TPU v5e (128-wide MXU)."""
    try:
        kind = jax.devices()[0].device_kind.lower()
    except Exception:
        return False
    return ("v5e" in kind) or ("v5 lite" in kind) or ("v5lite" in kind)


def _agent_kernel(x_ref, w1_ref, b1_ref, w2_ref, b2_ref, w3_ref, b3_ref,
                  out_ref, *, action_dim, hidden_dim, split_layer2):
    """Fused policy+value MLP on one batch tile.

    x:   [tile_b, S] bf16 (pre-cast in the wrapper)
    w1:  [S, 2H] bf16,  b1: [1, 2H] f32
    w2:  [2H, 2H] bf16 block-diag, OR [2, H, H] bf16 if split_layer2
    w3:  [2H, OUT] bf16 (OUT = 128-lane padded: [policy | value | zeros])
    out: [tile_b, OUT] f32 = [softmax(policy logits) | value | zeros]
    """
    x = x_ref[...]                                            # already bf16

    h = jnp.dot(x, w1_ref[...], preferred_element_type=jnp.float32) + b1_ref[...]
    h = jnp.maximum(h, 0.0).astype(jnp.bfloat16)

    if split_layer2:
        # v5e: two 128-wide matmuls instead of one 256-wide block-diagonal one.
        hp = jnp.dot(h[:, :hidden_dim], w2_ref[0],
                     preferred_element_type=jnp.float32)
        hv = jnp.dot(h[:, hidden_dim:], w2_ref[1],
                     preferred_element_type=jnp.float32)
        h2 = jnp.concatenate([hp, hv], axis=-1) + b2_ref[...]
    else:
        h2 = jnp.dot(h, w2_ref[...],
                     preferred_element_type=jnp.float32) + b2_ref[...]
    h2 = jnp.maximum(h2, 0.0).astype(jnp.bfloat16)

    z = jnp.dot(h2, w3_ref[...], preferred_element_type=jnp.float32) + b3_ref[...]

    # z: [tile_b, OUT]; cols [0, A) = policy logits, col A = value, rest = 0 pad.
    col = lax.broadcasted_iota(jnp.int32, z.shape, 1)
    is_logit = col < action_dim

    # Softmax over logit lanes only (exp(-inf) == 0 removes value/pad lanes).
    logits = jnp.where(is_logit, z, -jnp.inf)
    m = jnp.max(logits, axis=-1, keepdims=True)
    e = jnp.exp(logits - m)
    probs = e / jnp.sum(e, axis=-1, keepdims=True)            # exact: sums to 1

    # Lane-dense 128-wide store: probs in logit lanes, value / zeros elsewhere.
    out_ref[...] = jnp.where(is_logit, probs, z).astype(out_ref.dtype)


def pack_params(p, *, split_layer2=None):
    """Fuse policy/value nets into one stacked MLP (host side, done once).

    Layer 3 (and the kernel output) is zero-padded to a 128-lane width so the
    output store is a dense, unmasked vst: columns [0, A) hold the policy head,
    column A the value head, the remaining lanes are zeros.
    """
    if split_layer2 is None:
        split_layer2 = _is_v5e()

    S = p["pw1"].shape[0]
    H = p["pw2"].shape[0]
    A = p["pw3"].shape[1]
    out_cols = _round_up(A + 1, 128)
    f32, bf16 = jnp.float32, jnp.bfloat16

    w1 = jnp.concatenate([p["pw1"], p["vw1"]], axis=1).astype(bf16)       # [S, 2H]
    b1 = jnp.concatenate([p["pb1"], p["vb1"]], axis=1).astype(f32)        # [1, 2H]

    if split_layer2:
        w2 = jnp.stack([p["pw2"], p["vw2"]], axis=0).astype(bf16)         # [2, H, H]
    else:
        zhh = jnp.zeros((H, H), f32)
        w2 = jnp.block([[p["pw2"], zhh], [zhh, p["vw2"]]]).astype(bf16)   # [2H, 2H]
    b2 = jnp.concatenate([p["pb2"], p["vb2"]], axis=1).astype(f32)        # [1, 2H]

    w3 = jnp.zeros((2 * H, out_cols), f32)
    w3 = w3.at[:H, :A].set(p["pw3"])
    w3 = w3.at[H:, A].set(p["vw3"][:, 0])
    w3 = w3.astype(bf16)                                                  # [2H, OUT]
    b3 = jnp.zeros((1, out_cols), f32)
    b3 = b3.at[0, :A].set(p["pb3"][0])
    b3 = b3.at[0, A].set(p["vb3"][0, 0])

    return dict(w1=w1, b1=b1, w2=w2, b2=b2, w3=w3, b3=b3,
                state_dim=S, hidden_dim=H, action_dim=A,
                out_cols=out_cols, split_layer2=split_layer2)


def _choose_tiling(B, max_tile_b):
    # >= 2 tiles when B >= 32 so ("parallel",) actually shards across v7x's 2 TCs.
    n_tiles = _cdiv(B, max_tile_b)
    if B >= 32:
        n_tiles = max(n_tiles, 2)
    # bf16 activations pack 16 rows per vreg -> round the batch tile to 16.
    tile_b = _round_up(_cdiv(B, n_tiles), 16)
    return tile_b, n_tiles * tile_b, n_tiles


def policy_gradient_agent_forward(state, packed, *, max_tile_b=512,
                                  single_buffer_weights=False):
    """state: [B, state_dim].  packed: output of pack_params.

    Returns (action_probs [B, A], state_value [B, 1]) as in the PyTorch module.
    """
    B, S = state.shape
    A = packed["action_dim"]
    H = packed["hidden_dim"]
    H2 = 2 * H
    out_cols = packed["out_cols"]
    split_layer2 = packed["split_layer2"]

    # state is the only operand streamed per batch tile: pre-cast to bf16 (the
    # MXU input dtype) to halve its HBM->VMEM DMA; the kernel uses it directly.
    state = state.astype(jnp.bfloat16)

    tile_b, B_pad, n_tiles = _choose_tiling(B, max_tile_b)
    if B_pad != B:
        state = jnp.pad(state, ((0, B_pad - B), (0, 0)))

    def resident(shape):
        # Weights/biases stay resident in VMEM across all batch tiles.
        kwargs = {}
        if single_buffer_weights:
            # Constant index_map -> second pipeline buffer is pure waste.
            kwargs["pipeline_mode"] = pl.Buffered(1)
        return pl.BlockSpec(shape, lambda i: (0,) * len(shape), **kwargs)

    w2_spec = resident((2, H, H) if split_layer2 else (H2, H2))

    kernel = functools.partial(_agent_kernel, action_dim=A, hidden_dim=H,
                               split_layer2=split_layer2)

    out = pl.pallas_call(
        kernel,
        grid=(n_tiles,),
        in_specs=[
            pl.BlockSpec((tile_b, S), lambda i: (i, 0)),         # state: batch-tiled
            resident((S, H2)), resident((1, H2)),                # fused layer 1
            w2_spec, resident((1, H2)),                          # fused layer 2
            resident((H2, out_cols)), resident((1, out_cols)),   # fused layer 3
        ],
        out_specs=pl.BlockSpec((tile_b, out_cols), lambda i: (i, 0)),
        out_shape=jax.ShapeDtypeStruct((B_pad, out_cols), jnp.float32),
        compiler_params=pltpu.CompilerParams(
            # Split batch tiles across TensorCores on v7x; harmless on v5e/v6e.
            dimension_semantics=("parallel",),
        ),
    )(state, packed["w1"], packed["b1"], packed["w2"], packed["b2"],
      packed["w3"], packed["b3"])

    return out[:B, :A], out[:B, A:A + 1]


def init_params(key, state_dim, action_dim, hidden_dim):
    """Deterministic synthetic init (shapes match the PyTorch module).

    Weights stored as [in, out]; biases as [1, out] for TPU-friendly broadcast.
    """
    keys = jax.random.split(key, 12)

    def lin(kw, kb, fan_in, fan_out):
        bound = 1.0 / jnp.sqrt(fan_in)
        w = jax.random.uniform(kw, (fan_in, fan_out), jnp.float32, -bound, bound)
        b = jax.random.uniform(kb, (1, fan_out), jnp.float32, -bound, bound)
        return w, b

    pw1, pb1 = lin(keys[0], keys[1], state_dim, hidden_dim)
    pw2, pb2 = lin(keys[2], keys[3], hidden_dim, hidden_dim)
    pw3, pb3 = lin(keys[4], keys[5], hidden_dim, action_dim)
    vw1, vb1 = lin(keys[6], keys[7], state_dim, hidden_dim)
    vw2, vb2 = lin(keys[8], keys[9], hidden_dim, hidden_dim)
    vw3, vb3 = lin(keys[10], keys[11], hidden_dim, 1)
    return dict(pw1=pw1, pb1=pb1, pw2=pw2, pb2=pb2, pw3=pw3, pb3=pb3,
                vw1=vw1, vb1=vb1, vw2=vw2, vb2=vb2, vw3=vw3, vb3=vb3)


def _reference_forward(state, p):
    """Pure-JAX reference of the PyTorch forward (weights bf16-rounded like the kernel)."""
    # TODO(synk): the kernel keeps weights in bf16 (f32 accumulation); vs the true
    # f32 PyTorch module there is a small precision loss in the value head.
    def w(name):
        return p[name].astype(jnp.bfloat16).astype(jnp.float32)

    x = state.astype(jnp.bfloat16).astype(jnp.float32)
    h = jnp.maximum(x @ w("pw1") + p["pb1"], 0.0)
    h = jnp.maximum(h.astype(jnp.bfloat16).astype(jnp.float32) @ w("pw2") + p["pb2"], 0.0)
    logits = h.astype(jnp.bfloat16).astype(jnp.float32) @ w("pw3") + p["pb3"]
    probs = jax.nn.softmax(logits, axis=-1)

    g = jnp.maximum(x @ w("vw1") + p["vb1"], 0.0)
    g = jnp.maximum(g.astype(jnp.bfloat16).astype(jnp.float32) @ w("vw2") + p["vb2"], 0.0)
    value = g.astype(jnp.bfloat16).astype(jnp.float32) @ w("vw3") + p["vb3"]
    return probs, value


if __name__ == "__main__":
    B, STATE_DIM, ACTION_DIM, HIDDEN_DIM = 8, 16, 4, 128

    key = jax.random.PRNGKey(0)
    k_state, k_params = jax.random.split(key)
    state = jax.random.normal(k_state, (B, STATE_DIM), jnp.float32)
    params = init_params(k_params, STATE_DIM, ACTION_DIM, HIDDEN_DIM)
    packed = pack_params(params)   # auto-selects v5e split-layer-2 path if applicable

    action_probs, state_value = policy_gradient_agent_forward(state, packed)
    jax.block_until_ready((action_probs, state_value))

    ref_probs, ref_value = _reference_forward(state, params)
    assert action_probs.shape == (B, ACTION_DIM)
    assert state_value.shape == (B, 1)
    # bf16 matmul inputs -> modest tolerances vs the f32-accumulated reference.
    assert jnp.allclose(action_probs, ref_probs, atol=2e-2, rtol=2e-2)
    assert jnp.allclose(state_value, ref_value, atol=2e-2, rtol=2e-2)
    # Exact softmax divide in-kernel: probabilities are normalized.
    assert jnp.allclose(jnp.sum(action_probs, axis=-1), 1.0, atol=1e-3)

    print("KERNEL_OK")
</pallas_src>

<mosaic_0001>
module attributes {stable_mosaic.version = 11 : i64} {
  func.func @_agent_kernel(%arg0: i32, %arg1: memref<16x16xbf16, #tpu.memory_space<vmem>>, %arg2: memref<16x256xbf16, #tpu.memory_space<vmem>>, %arg3: memref<1x256xf32, #tpu.memory_space<vmem>>, %arg4: memref<256x256xbf16, #tpu.memory_space<vmem>>, %arg5: memref<1x256xf32, #tpu.memory_space<vmem>>, %arg6: memref<256x128xbf16, #tpu.memory_space<vmem>>, %arg7: memref<1x128xf32, #tpu.memory_space<vmem>>, %arg8: memref<16x128xf32, #tpu.memory_space<vmem>>) attributes {dimension_semantics = [#tpu.dimension_semantics<parallel>], iteration_bounds = array<i64: 1>, scalar_prefetch = 0 : i64, scratch_operands = 0 : i64, tpu.core_type = #tpu.core_type<tc>, window_params = [{transform_indices = @transform_0, window_bounds = array<i64: 16, 16>}, {pipeline_mode = #tpu.pipeline_mode<synchronous>, transform_indices = @transform_1, window_bounds = array<i64: 16, 256>}, {pipeline_mode = #tpu.pipeline_mode<synchronous>, transform_indices = @transform_2, window_bounds = array<i64: 1, 256>}, {pipeline_mode = #tpu.pipeline_mode<synchronous>, transform_indices = @transform_3, window_bounds = array<i64: 256, 256>}, {pipeline_mode = #tpu.pipeline_mode<synchronous>, transform_indices = @transform_4, window_bounds = array<i64: 1, 256>}, {pipeline_mode = #tpu.pipeline_mode<synchronous>, transform_indices = @transform_5, window_bounds = array<i64: 256, 128>}, {pipeline_mode = #tpu.pipeline_mode<synchronous>, transform_indices = @transform_6, window_bounds = array<i64: 1, 128>}, {transform_indices = @transform_7, window_bounds = array<i64: 16, 128>}]} {
    %c0 = arith.constant 0 : index
    %c0_0 = arith.constant 0 : index
    %0 = vector.load %arg1[%c0, %c0_0] : memref<16x16xbf16, #tpu.memory_space<vmem>>, vector<16x16xbf16>
    %c0_1 = arith.constant 0 : index
    %c0_2 = arith.constant 0 : index
    %1 = vector.load %arg2[%c0_1, %c0_2] : memref<16x256xbf16, #tpu.memory_space<vmem>>, vector<16x256xbf16>
    %cst = arith.constant dense<0.000000e+00> : vector<16x256xf32>
    %2 = tpu.matmul %0, %1, %cst {dimension_numbers = #tpu.dot_dimension_numbers<[1], [0], [0], [1], [0, 0, 1, 1], [], []>} : vector<16x16xbf16>, vector<16x256xbf16>, vector<16x256xf32> -> vector<16x256xf32>
    %c0_3 = arith.constant 0 : index
    %c0_4 = arith.constant 0 : index
    %3 = vector.load %arg3[%c0_3, %c0_4] : memref<1x256xf32, #tpu.memory_space<vmem>>, vector<1x256xf32>
    %4 = vector.broadcast %3 : vector<1x256xf32> to vector<16x256xf32>
    %5 = arith.addf %2, %4 : vector<16x256xf32>
    %cst_5 = arith.constant 0.000000e+00 : f32
    %6 = vector.broadcast %cst_5 : f32 to vector<16x256xf32>
    %7 = arith.maximumf %5, %6 : vector<16x256xf32>
    %8 = arith.truncf %7 : vector<16x256xf32> to vector<16x256xbf16>
    %c0_6 = arith.constant 0 : index
    %c0_7 = arith.constant 0 : index
    %9 = vector.load %arg4[%c0_6, %c0_7] : memref<256x256xbf16, #tpu.memory_space<vmem>>, vector<256x256xbf16>
    %cst_8 = arith.constant dense<0.000000e+00> : vector<16x256xf32>
    %10 = tpu.matmul %8, %9, %cst_8 {dimension_numbers = #tpu.dot_dimension_numbers<[1], [0], [0], [1], [0, 0, 1, 1], [], []>} : vector<16x256xbf16>, vector<256x256xbf16>, vector<16x256xf32> -> vector<16x256xf32>
    %c0_9 = arith.constant 0 : index
    %c0_10 = arith.constant 0 : index
    %11 = vector.load %arg5[%c0_9, %c0_10] : memref<1x256xf32, #tpu.memory_space<vmem>>, vector<1x256xf32>
    %12 = vector.broadcast %11 : vector<1x256xf32> to vector<16x256xf32>
    %13 = arith.addf %10, %12 : vector<16x256xf32>
    %cst_11 = arith.constant 0.000000e+00 : f32
    %14 = vector.broadcast %cst_11 : f32 to vector<16x256xf32>
    %15 = arith.maximumf %13, %14 : vector<16x256xf32>
    %16 = arith.truncf %15 : vector<16x256xf32> to vector<16x256xbf16>
    %c0_12 = arith.constant 0 : index
    %c0_13 = arith.constant 0 : index
    %17 = vector.load %arg6[%c0_12, %c0_13] : memref<256x128xbf16, #tpu.memory_space<vmem>>, vector<256x128xbf16>
    %cst_14 = arith.constant dense<0.000000e+00> : vector<16x128xf32>
    %18 = tpu.matmul %16, %17, %cst_14 {dimension_numbers = #tpu.dot_dimension_numbers<[1], [0], [0], [1], [0, 0, 1, 1], [], []>} : vector<16x256xbf16>, vector<256x128xbf16>, vector<16x128xf32> -> vector<16x128xf32>
    %c0_15 = arith.constant 0 : index
    %c0_16 = arith.constant 0 : index
    %19 = vector.load %arg7[%c0_15, %c0_16] : memref<1x128xf32, #tpu.memory_space<vmem>>, vector<1x128xf32>
    %20 = vector.broadcast %19 : vector<1x128xf32> to vector<16x128xf32>
    %21 = arith.addf %18, %20 : vector<16x128xf32>
    %22 = tpu.iota {dimensions = array<i32: 1>} : vector<16x128xi32>
    %c4_i32 = arith.constant 4 : i32
    %23 = vector.broadcast %c4_i32 : i32 to vector<16x128xi32>
    %24 = arith.cmpi slt, %22, %23 : vector<16x128xi32>
    %cst_17 = arith.constant 0xFF800000 : f32
    %25 = vector.broadcast %cst_17 : f32 to vector<16x128xf32>
    %26 = arith.select %24, %21, %25 : vector<16x128xi1>, vector<16x128xf32>
    %cst_18 = arith.constant dense<0xFF800000> : vector<16xf32>
    %27 = vector.multi_reduction <maximumf>, %26, %cst_18 [1] : vector<16x128xf32> to vector<16xf32>
    %28 = vector.shape_cast %27 : vector<16xf32> to vector<16x1xf32>
    %29 = vector.broadcast %28 : vector<16x1xf32> to vector<16x128xf32>
    %30 = arith.subf %26, %29 : vector<16x128xf32>
    %31 = math.exp %30 : vector<16x128xf32>
    %cst_19 = arith.constant dense<0.000000e+00> : vector<16xf32>
    %32 = vector.multi_reduction <add>, %31, %cst_19 [1] : vector<16x128xf32> to vector<16xf32>
    %33 = vector.shape_cast %32 : vector<16xf32> to vector<16x1xf32>
    %34 = vector.broadcast %33 : vector<16x1xf32> to vector<16x128xf32>
    %35 = arith.divf %31, %34 : vector<16x128xf32>
    %36 = arith.select %24, %35, %21 : vector<16x128xi1>, vector<16x128xf32>
    %c0_20 = arith.constant 0 : index
    %c0_21 = arith.constant 0 : index
    %37 = vector.load %arg8[%c0_20, %c0_21] : memref<16x128xf32, #tpu.memory_space<vmem>>, vector<16x128xf32>
    tpu.vector_store %arg8[%c0_20, %c0_21], %36 {strides = array<i32>} : memref<16x128xf32, #tpu.memory_space<vmem>>, vector<16x128xf32>,
    return
  }
  func.func @transform_0(%arg0: i32) -> (i32, i32) {
    %c0_i32 = arith.constant 0 : i32
    %c0_i32_0 = arith.constant 0 : i32
    return %arg0, %c0_i32 : i32, i32
  }
  func.func @transform_1(%arg0: i32) -> (i32, i32) {
    %c0_i32 = arith.constant 0 : i32
    %c0_i32_0 = arith.constant 0 : i32
    %c0_i32_1 = arith.constant 0 : i32
    return %c0_i32, %c0_i32_0 : i32, i32
  }
  func.func @transform_2(%arg0: i32) -> (i32, i32) {
    %c0_i32 = arith.constant 0 : i32
    %c0_i32_0 = arith.constant 0 : i32
    %c0_i32_1 = arith.constant 0 : i32
    return %c0_i32, %c0_i32_0 : i32, i32
  }
  func.func @transform_3(%arg0: i32) -> (i32, i32) {
    %c0_i32 = arith.constant 0 : i32
    %c0_i32_0 = arith.constant 0 : i32
    %c0_i32_1 = arith.constant 0 : i32
    return %c0_i32, %c0_i32_0 : i32, i32
  }
  func.func @transform_4(%arg0: i32) -> (i32, i32) {
    %c0_i32 = arith.constant 0 : i32
    %c0_i32_0 = arith.constant 0 : i32
    %c0_i32_1 = arith.constant 0 : i32
    return %c0_i32, %c0_i32_0 : i32, i32
  }
  func.func @transform_5(%arg0: i32) -> (i32, i32) {
    %c0_i32 = arith.constant 0 : i32
    %c0_i32_0 = arith.constant 0 : i32
    %c0_i32_1 = arith.constant 0 : i32
    return %c0_i32, %c0_i32_0 : i32, i32
  }
  func.func @transform_6(%arg0: i32) -> (i32, i32) {
    %c0_i32 = arith.constant 0 : i32
    %c0_i32_0 = arith.constant 0 : i32
    %c0_i32_1 = arith.constant 0 : i32
    return %c0_i32, %c0_i32_0 : i32, i32
  }
  func.func @transform_7(%arg0: i32) -> (i32, i32) {
    %c0_i32 = arith.constant 0 : i32
    %c0_i32_0 = arith.constant 0 : i32
    return %arg0, %c0_i32 : i32, i32
  }
}

</mosaic_0001>

<llo_original>
// kernel: tpu_custom_call.1
$region0: #{tpu_custom_call.1}
  #allocation0 [shape = 'u32[]', space=smem, size = 0x4, offset = 0x4, fixed_abs, tag = 'smem constant byte address 0x4 - core index']
  #allocation1 [shape = 'u32[144,128]{1,0:T(1,128)}', space=vmem, size = 0x12000, scoped, tag = 'internal scratch']
  %s0 = inlined_call_operand.hbm [shape: bf16[16,16], index: 0, kind: input, shape index: {}]
  %s1 = inlined_call_operand.hbm [shape: bf16[16,256], index: 1, kind: input, shape index: {}]
  %s2 = inlined_call_operand.vmem [shape: f32[1,256], index: 2, kind: input, shape index: {}]
  %s3 = inlined_call_operand.hbm [shape: bf16[256,256], index: 3, kind: input, shape index: {}]
  %s4 = inlined_call_operand.vmem [shape: f32[1,256], index: 4, kind: input, shape index: {}]
  %s5 = inlined_call_operand.hbm [shape: bf16[256,128], index: 5, kind: input, shape index: {}]
  %s6 = inlined_call_operand.vmem [shape: f32[1,128], index: 6, kind: input, shape index: {}]
  %s7 = inlined_call_operand.hbm [shape: f32[16,128], index: 7, kind: output, shape index: {}]
  %s8 = sld [smem:[#allocation0]]
  $region54: #{tpu_custom_call.1} parent=0
    _
  %s10 = ssub.s32 1, %s8
  %s11 = scalar_select 0, %s10, %s8
  $region1: #{tpu_custom_call.1} parent=0
    #allocation2 [shape = 'u8[4096]{0}', space=vmem, size = 0x1000, scoped, tag = 'input window, operand 0, single buffered']
    #allocation3 [shape = 's32[1]{0}', space=sflag, size = 0x4, scoped, tag = 'scoped memory for tpu_custom_call.1']
    #allocation4 [shape = 's32[1]{0}', space=sflag, size = 0x4, scoped, tag = 'scoped memory for tpu_custom_call.1']
    #allocation5 [shape = 'u8[8192]{0}', space=vmem, size = 0x2000, scoped, tag = 'input window, operand 1, single buffered']
    #allocation6 [shape = 's32[1]{0}', space=sflag, size = 0x4, scoped, tag = 'scoped memory for tpu_custom_call.1']
    #allocation7 [shape = 'u8[131072]{0}', space=vmem, size = 0x20000, scoped, tag = 'input window, operand 3, single buffered']
    #allocation8 [shape = 'u8[65536]{0}', space=vmem, size = 0x10000, scoped, tag = 'input window, operand 5, single buffered']
    #allocation9 [shape = 's32[1]{0}', space=sflag, size = 0x4, scoped, tag = 'scoped memory for tpu_custom_call.1']
    #allocation10 [shape = 'u8[8192]{0}', space=vmem, size = 0x2000, scoped, tag = 'output window, operand 0, single buffered']
    %12 = vsyncpa [#allocation3], 0
    %13 = vsyncpa [#allocation6], 0
    %14 = vsyncpa [#allocation9], 0
    %15 = vsyncpa [#allocation4], 0
    // Predicated region
    $region2: #{tpu_custom_call.1} parent=1 // pred_check
      _
    $region3: #{tpu_custom_call.1} parent=1 // pred_check_branch
      %17 = sbr.rel (0) target = $region5
    $region4: #{tpu_custom_call.1} parent=1 // pred_region
      %s19 = ssub.s32 128, 128
      %20 = vsyncadd [#allocation3], %s19
      %s21 = sshll.u32 [#allocation2], 4
      %s22 = int_to_ptr.vmem [resolvable:$true] %s21
      %27 = dma.hbm_to_vmem [thread:$0]  %s0, 128, %s22, [#allocation3], 64, 64, 4
    $region5: #{tpu_custom_call.1} parent=1 // pred_fallthru
      _
    // Predicated region
    $region6: #{tpu_custom_call.1} parent=1 // pred_check
      _
    $region7: #{tpu_custom_call.1} parent=1 // pred_check_branch
      %29 = sbr.rel (0) target = $region9
    $region8: #{tpu_custom_call.1} parent=1 // pred_region
      %s31 = ssub.s32 256, 256
      %32 = vsyncadd [#allocation6], %s31
      %s33 = sshll.u32 [#allocation5], 4
      %s34 = int_to_ptr.vmem [resolvable:$true] %s33
      %39 = dma.hbm_to_vmem [thread:$0]  %s1, 256, %s34, [#allocation6], 128, 128, 8
    $region9: #{tpu_custom_call.1} parent=1 // pred_fallthru
      _
    // Predicated region
    $region10: #{tpu_custom_call.1} parent=1 // pred_check
      _
    $region11: #{tpu_custom_call.1} parent=1 // pred_check_branch
      %41 = sbr.rel (0) target = $region13
    $region12: #{tpu_custom_call.1} parent=1 // pred_region
      _
    $region13: #{tpu_custom_call.1} parent=1 // pred_fallthru
      _
    // Predicated region
    $region14: #{tpu_custom_call.1} parent=1 // pred_check
      _
    $region15: #{tpu_custom_call.1} parent=1 // pred_check_branch
      %43 = sbr.rel (0) target = $region17
    $region16: #{tpu_custom_call.1} parent=1 // pred_region
      %s45 = ssub.s32 4096, 4096
      %46 = vsyncadd [#allocation6], %s45
      %s47 = sshll.u32 [#allocation7], 4
      %s48 = int_to_ptr.vmem [resolvable:$true] %s47
      %53 = dma.hbm_to_vmem [thread:$0]  %s3, 4096, %s48, [#allocation6], 128, 128, 8
    $region17: #{tpu_custom_call.1} parent=1 // pred_fallthru
      _
    // Predicated region
    $region18: #{tpu_custom_call.1} parent=1 // pred_check
      _
    $region19: #{tpu_custom_call.1} parent=1 // pred_check_branch
      %55 = sbr.rel (0) target = $region21
    $region20: #{tpu_custom_call.1} parent=1 // pred_region
      _
    $region21: #{tpu_custom_call.1} parent=1 // pred_fallthru
      _
    // Predicated region
    $region22: #{tpu_custom_call.1} parent=1 // pred_check
      _
    $region23: #{tpu_custom_call.1} parent=1 // pred_check_branch
      %57 = sbr.rel (0) target = $region25
    $region24: #{tpu_custom_call.1} parent=1 // pred_region
      %s59 = ssub.s32 2048, 2048
      %60 = vsyncadd [#allocation9], %s59
      %s61 = sshll.u32 [#allocation8], 4
      %s62 = int_to_ptr.vmem [resolvable:$true] %s61
      %67 = dma.hbm_to_vmem [thread:$0]  %s5, 2048, %s62, [#allocation9], 64, 64, 4
    $region25: #{tpu_custom_call.1} parent=1 // pred_fallthru
      _
    // Predicated region
    $region26: #{tpu_custom_call.1} parent=1 // pred_check
      _
    $region27: #{tpu_custom_call.1} parent=1 // pred_check_branch
      %69 = sbr.rel (0) target = $region29
    $region28: #{tpu_custom_call.1} parent=1 // pred_region
      _
    $region29: #{tpu_custom_call.1} parent=1 // pred_fallthru
      _
    // Predicated region
    $region30: #{tpu_custom_call.1} parent=1 // pred_check
      _
    $region31: #{tpu_custom_call.1} parent=1 // pred_check_branch
      %71 = sbr.rel (0) target = $region33
    $region32: #{tpu_custom_call.1} parent=1 // pred_region
      %72 = dma.done [#allocation3], 128
    $region33: #{tpu_custom_call.1} parent=1 // pred_fallthru
      _
    // Predicated region
    $region34: #{tpu_custom_call.1} parent=1 // pred_check
      _
    $region35: #{tpu_custom_call.1} parent=1 // pred_check_branch
      %74 = sbr.rel (0) target = $region37
    $region36: #{tpu_custom_call.1} parent=1 // pred_region
      %75 = dma.done [#allocation6], 256
    $region37: #{tpu_custom_call.1} parent=1 // pred_fallthru
      _
    // Predicated region
    $region38: #{tpu_custom_call.1} parent=1 // pred_check
      _
    $region39: #{tpu_custom_call.1} parent=1 // pred_check_branch
      %77 = sbr.rel (0) target = $region41
    $region40: #{tpu_custom_call.1} parent=1 // pred_region
      %78 = dma.done [#allocation6], 4096
    $region41: #{tpu_custom_call.1} parent=1 // pred_fallthru
      _
    // Predicated region
    $region42: #{tpu_custom_call.1} parent=1 // pred_check
      _
    $region43: #{tpu_custom_call.1} parent=1 // pred_check_branch
      %80 = sbr.rel (0) target = $region45
    $region44: #{tpu_custom_call.1} parent=1 // pred_region
      %81 = dma.done [#allocation9], 2048
    $region45: #{tpu_custom_call.1} parent=1 // pred_fallthru
      _
    %v83 = vld [vmem:[#allocation2] sm:$0xf]
    %v84 = vld [vmem:[#allocation2 + $0x4] sm:$0xf]
    %v85 = vld [vmem:[#allocation5] sm:$0xff]
    %v86 = vld [vmem:[#allocation5 + $0x8] sm:$0xff]
    %v87 = vld [vmem:[%s2] sm:$0x3]
    %v89 = vlaneseq
    %v90 = vshrl.u32 %v89, 7
    %v91 = vsub.s32 0, %v90
    %v92 = vrot.slane %v87, %v91
    %v93 = vlaneseq
    %v94 = vshrl.u32 %v93, 7
    %v95 = vsub.s32 1, %v94
    %v96 = vrot.slane %v87, %v95
    %v101 = vunpack.c.l.b16 %v83
    %v102 = vunpack.c.l.b16 %v84
    %v103 = vpack.c.b16 %v102, %v101
    %v106 = vunpack.c.l.b16 %v85
    %v107 = vunpack.c.h.b16 %v85
    %v108 = vunpack.c.l.b16 %v86
    %v109 = vunpack.c.h.b16 %v86
    %v110 = vpack.c.b16 %v108, %v106
    %v111 = vpack.c.b16 %v109, %v107
    %vm114 = vcmask 130048
    %v116 = vsel %vm114, %v103, 0
    %118 = vmatprep.subr.bf16.mxu0 %v111
    %119 = vmatpush1.bf16.msra.mxu0 %v110
    %120 = vmatprep.subr.bf16.mxu0 0
    %121 = vmatpush1.bf16.msra.mxu0 0
    %122 = vmatprep.subr.bf16.mxu0 0
    %123 = vmatpush1.bf16.msra.mxu0 0
    %124 = vmatprep.subr.bf16.mxu0 0
    %125 = vmatpush1.bf16.msra.mxu0 0
    %126 = vmatprep.subr.bf16.mxu0 0
    %127 = vmatpush1.bf16.msra.mxu0 0
    %128 = vmatprep.subr.bf16.mxu0 0
    %129 = vmatpush1.bf16.msra.mxu0 0
    %130 = vmatprep.subr.bf16.mxu0 0
    %131 = vmatpush1.bf16.msra.mxu0 0
    %132 = vmatprep.subr.bf16.mxu0 0
    %133 = vmatpush1.bf16.msra.mxu0 0
    %134 = vmatprep.subr.bf16.mxu0 0
    %135 = vmatpush1.bf16.msra.mxu0 0
    %136 = vmatprep.subr.bf16.mxu0 0
    %137 = vmatpush1.bf16.msra.mxu0 0
    %138 = vmatprep.subr.bf16.mxu0 0
    %139 = vmatpush1.bf16.msra.mxu0 0
    %140 = vmatprep.subr.bf16.mxu0 0
    %141 = vmatpush1.bf16.msra.mxu0 0
    %142 = vmatprep.subr.bf16.mxu0 0
    %143 = vmatpush1.bf16.msra.mxu0 0
    %144 = vmatprep.subr.bf16.mxu0 0
    %145 = vmatpush1.bf16.msra.mxu0 0
    %146 = vmatprep.subr.bf16.mxu0 0
    %147 = vmatpush1.bf16.msra.mxu0 0
    %148 = vmatprep.subr.bf16.mxu0 0
    %149 = vmatpush1.bf16.msra.mxu0 0
    %150 = vmatprep.mubr.bf16.mxu0 0
    %151 = vmatmul.mubr.bf16.gmra.mrb[0].mxu0 %v116
    %v152 = vpop.f32.mrb[0].mxu0
    %v153 = vadd.f32 %v92, %v152
    %v154 = vpop.f32.mrb[0].mxu0
    %v155 = vadd.f32 %v96, %v154
    %v156 = vpop.f32.mrb[0].mxu0
    %v157 = vadd.f32 %v92, %v156
    %v158 = vpop.f32.mrb[0].mxu0
    %v159 = vadd.f32 %v96, %v158
    %160 = vdwg.mxu0
    %v161 = vmax.f32 %v153, 0.0
    %v162 = vmax.f32 %v155, 0.0
    %v163 = vmax.f32 %v157, 0.0
    %v164 = vmax.f32 %v159, 0.0
    %v165 = vpack.c.bf16 %v163, %v161
    %v166 = vpack.c.bf16 %v164, %v162
    %v167 = vld [vmem:[#allocation7] sm:$0xff]
    %v168 = vld [vmem:[#allocation7 + $0x8] sm:$0xff]
    %v169 = vld [vmem:[#allocation7 + $0x10] sm:$0xff]
    %v170 = vld [vmem:[#allocation7 + $0x18] sm:$0xff]
    %v171 = vld [vmem:[#allocation7 + $0x20] sm:$0xff]
    %v172 = vld [vmem:[#allocation7 + $0x28] sm:$0xff]
    %v173 = vld [vmem:[#allocation7 + $0x30] sm:$0xff]
    %v174 = vld [vmem:[#allocation7 + $0x38] sm:$0xff]
    %v175 = vld [vmem:[#allocation7 + $0x40] sm:$0xff]
    %v176 = vld [vmem:[#allocation7 + $0x48] sm:$0xff]
    %v177 = vld [vmem:[#allocation7 + $0x50] sm:$0xff]
    %v178 = vld [vmem:[#allocation7 + $0x58] sm:$0xff]
    %v179 = vld [vmem:[#allocation7 + $0x60] sm:$0xff]
    %v180 = vld [vmem:[#allocation7 + $0x68] sm:$0xff]
    %v181 = vld [vmem:[#allocation7 + $0x70] sm:$0xff]
    %v182 = vld [vmem:[#allocation7 + $0x78] sm:$0xff]
    %v183 = vld [vmem:[#allocation7 + $0x80] sm:$0xff]
    %v184 = vld [vmem:[#allocation7 + $0x88] sm:$0xff]
    %v185 = vld [vmem:[#allocation7 + $0x90] sm:$0xff]
    %v186 = vld [vmem:[#allocation7 + $0x98] sm:$0xff]
    %v187 = vld [vmem:[#allocation7 + $0xa0] sm:$0xff]
    %v188 = vld [vmem:[#allocation7 + $0xa8] sm:$0xff]
    %v189 = vld [vmem:[#allocation7 + $0xb0] sm:$0xff]
    %v190 = vld [vmem:[#allocation7 + $0xb8] sm:$0xff]
    %v191 = vld [vmem:[#allocation7 + $0xc0] sm:$0xff]
    %v192 = vld [vmem:[#allocation7 + $0xc8] sm:$0xff]
    %v193 = vld [vmem:[#allocation7 + $0xd0] sm:$0xff]
    %v194 = vld [vmem:[#allocation7 + $0xd8] sm:$0xff]
    %v195 = vld [vmem:[#allocation7 + $0xe0] sm:$0xff]
    %v196 = vld [vmem:[#allocation7 + $0xe8] sm:$0xff]
    %v197 = vld [vmem:[#allocation7 + $0xf0] sm:$0xff]
    %v198 = vld [vmem:[#allocation7 + $0xf8] sm:$0xff]
    %v199 = vld [vmem:[%s4] sm:$0x3]
    %v201 = vlaneseq
    %v202 = vshrl.u32 %v201, 7
    %v203 = vsub.s32 0, %v202
    %v204 = vrot.slane %v199, %v203
    %v205 = vlaneseq
    %v206 = vshrl.u32 %v205, 7
    %v207 = vsub.s32 1, %v206
    %v208 = vrot.slane %v199, %v207
    %v243 = vunpack.c.l.b16 %v167
    %v244 = vunpack.c.h.b16 %v167
    %v245 = vunpack.c.l.b16 %v168
    %v246 = vunpack.c.h.b16 %v168
    %v247 = vunpack.c.l.b16 %v169
    %v248 = vunpack.c.h.b16 %v169
    %v249 = vunpack.c.l.b16 %v170
    %v250 = vunpack.c.h.b16 %v170
    %v251 = vunpack.c.l.b16 %v171
    %v252 = vunpack.c.h.b16 %v171
    %v253 = vunpack.c.l.b16 %v172
    %v254 = vunpack.c.h.b16 %v172
    %v255 = vunpack.c.l.b16 %v173
    %v256 = vunpack.c.h.b16 %v173
    %v257 = vunpack.c.l.b16 %v174
    %v258 = vunpack.c.h.b16 %v174
    %v259 = vunpack.c.l.b16 %v175
    %v260 = vunpack.c.h.b16 %v175
    %v261 = vunpack.c.l.b16 %v176
    %v262 = vunpack.c.h.b16 %v176
    %v263 = vunpack.c.l.b16 %v177
    %v264 = vunpack.c.h.b16 %v177
    %v265 = vunpack.c.l.b16 %v178
    %v266 = vunpack.c.h.b16 %v178
    %v267 = vunpack.c.l.b16 %v179
    %v268 = vunpack.c.h.b16 %v179
    %v269 = vunpack.c.l.b16 %v180
    %v270 = vunpack.c.h.b16 %v180
    %v271 = vunpack.c.l.b16 %v181
    %v272 = vunpack.c.h.b16 %v181
    %v273 = vunpack.c.l.b16 %v182
    %v274 = vunpack.c.h.b16 %v182
    %v275 = vunpack.c.l.b16 %v183
    %v276 = vunpack.c.h.b16 %v183
    %v277 = vunpack.c.l.b16 %v184
    %v278 = vunpack.c.h.b16 %v184
    %v279 = vunpack.c.l.b16 %v185
    %v280 = vunpack.c.h.b16 %v185
    %v281 = vunpack.c.l.b16 %v186
    %v282 = vunpack.c.h.b16 %v186
    %v283 = vunpack.c.l.b16 %v187
    %v284 = vunpack.c.h.b16 %v187
    %v285 = vunpack.c.l.b16 %v188
    %v286 = vunpack.c.h.b16 %v188
    %v287 = vunpack.c.l.b16 %v189
    %v288 = vunpack.c.h.b16 %v189
    %v289 = vunpack.c.l.b16 %v190
    %v290 = vunpack.c.h.b16 %v190
    %v291 = vunpack.c.l.b16 %v191
    %v292 = vunpack.c.h.b16 %v191
    %v293 = vunpack.c.l.b16 %v192
    %v294 = vunpack.c.h.b16 %v192
    %v295 = vunpack.c.l.b16 %v193
    %v296 = vunpack.c.h.b16 %v193
    %v297 = vunpack.c.l.b16 %v194
    %v298 = vunpack.c.h.b16 %v194
    %v299 = vunpack.c.l.b16 %v195
    %v300 = vunpack.c.h.b16 %v195
    %v301 = vunpack.c.l.b16 %v196
    %v302 = vunpack.c.h.b16 %v196
    %v303 = vunpack.c.l.b16 %v197
    %v304 = vunpack.c.h.b16 %v197
    %v305 = vunpack.c.l.b16 %v198
    %v306 = vunpack.c.h.b16 %v198
    %v307 = vpack.c.b16 %v245, %v243
    %v308 = vpack.c.b16 %v246, %v244
    %v309 = vpack.c.b16 %v249, %v247
    %v310 = vpack.c.b16 %v250, %v248
    %v311 = vpack.c.b16 %v253, %v251
    %v312 = vpack.c.b16 %v254, %v252
    %v313 = vpack.c.b16 %v257, %v255
    %v314 = vpack.c.b16 %v258, %v256
    %v315 = vpack.c.b16 %v261, %v259
    %v316 = vpack.c.b16 %v262, %v260
    %v317 = vpack.c.b16 %v265, %v263
    %v318 = vpack.c.b16 %v266, %v264
    %v319 = vpack.c.b16 %v269, %v267
    %v320 = vpack.c.b16 %v270, %v268
    %v321 = vpack.c.b16 %v273, %v271
    %v322 = vpack.c.b16 %v274, %v272
    %v323 = vpack.c.b16 %v277, %v275
    %v324 = vpack.c.b16 %v278, %v276
    %v325 = vpack.c.b16 %v281, %v279
    %v326 = vpack.c.b16 %v282, %v280
    %v327 = vpack.c.b16 %v285, %v283
    %v328 = vpack.c.b16 %v286, %v284
    %v329 = vpack.c.b16 %v289, %v287
    %v330 = vpack.c.b16 %v290, %v288
    %v331 = vpack.c.b16 %v293, %v291
    %v332 = vpack.c.b16 %v294, %v292
    %v333 = vpack.c.b16 %v297, %v295
    %v334 = vpack.c.b16 %v298, %v296
    %v335 = vpack.c.b16 %v301, %v299
    %v336 = vpack.c.b16 %v302, %v300
    %v337 = vpack.c.b16 %v305, %v303
    %v338 = vpack.c.b16 %v306, %v304
    %371 = vmatprep.subr.bf16.mxu0 %v308
    %372 = vmatpush1.bf16.msra.mxu0 %v307
    %373 = vmatprep.subr.bf16.mxu0 %v310
    %374 = vmatpush1.bf16.msra.mxu0 %v309
    %375 = vmatprep.subr.bf16.mxu0 %v312
    %376 = vmatpush1.bf16.msra.mxu0 %v311
    %377 = vmatprep.subr.bf16.mxu0 %v314
    %378 = vmatpush1.bf16.msra.mxu0 %v313
    %379 = vmatprep.subr.bf16.mxu0 %v316
    %380 = vmatpush1.bf16.msra.mxu0 %v315
    %381 = vmatprep.subr.bf16.mxu0 %v318
    %382 = vmatpush1.bf16.msra.mxu0 %v317
    %383 = vmatprep.subr.bf16.mxu0 %v320
    %384 = vmatpush1.bf16.msra.mxu0 %v319
    %385 = vmatprep.subr.bf16.mxu0 %v322
    %386 = vmatpush1.bf16.msra.mxu0 %v321
    %387 = vmatprep.subr.bf16.mxu0 %v324
    %388 = vmatpush1.bf16.msra.mxu0 %v323
    %389 = vmatprep.subr.bf16.mxu0 %v326
    %390 = vmatpush1.bf16.msra.mxu0 %v325
    %391 = vmatprep.subr.bf16.mxu0 %v328
    %392 = vmatpush1.bf16.msra.mxu0 %v327
    %393 = vmatprep.subr.bf16.mxu0 %v330
    %394 = vmatpush1.bf16.msra.mxu0 %v329
    %395 = vmatprep.subr.bf16.mxu0 %v332
    %396 = vmatpush1.bf16.msra.mxu0 %v331
    %397 = vmatprep.subr.bf16.mxu0 %v334
    %398 = vmatpush1.bf16.msra.mxu0 %v333
    %399 = vmatprep.subr.bf16.mxu0 %v336
    %400 = vmatpush1.bf16.msra.mxu0 %v335
    %401 = vmatprep.subr.bf16.mxu0 %v338
    %402 = vmatpush1.bf16.msra.mxu0 %v337
    %403 = vmatprep.mubr.bf16.mxu0 %v166
    %404 = vmatmul.mubr.bf16.gmra.mrb[0].mxu0 %v165
    %v405 = vpop.f32.mrb[0].mxu0
    %v406 = vadd.f32 %v204, %v405
    %v407 = vpop.f32.mrb[0].mxu0
    %v408 = vadd.f32 %v208, %v407
    %v409 = vpop.f32.mrb[0].mxu0
    %v410 = vadd.f32 %v204, %v409
    %v411 = vpop.f32.mrb[0].mxu0
    %v412 = vadd.f32 %v208, %v411
    %413 = vdwg.mxu0
    %v414 = vmax.f32 %v406, 0.0
    %v415 = vmax.f32 %v408, 0.0
    %v416 = vmax.f32 %v410, 0.0
    %v417 = vmax.f32 %v412, 0.0
    %v418 = vpack.c.bf16 %v416, %v414
    %v419 = vpack.c.bf16 %v417, %v415
    %v420 = vld [vmem:[#allocation8] sm:$0xf]
    %v421 = vld [vmem:[#allocation8 + $0x4] sm:$0xf]
    %v422 = vld [vmem:[#allocation8 + $0x8] sm:$0xf]
    %v423 = vld [vmem:[#allocation8 + $0xc] sm:$0xf]
    %v424 = vld [vmem:[#allocation8 + $0x10] sm:$0xf]
    %v425 = vld [vmem:[#allocation8 + $0x14] sm:$0xf]
    %v426 = vld [vmem:[#allocation8 + $0x18] sm:$0xf]
    %v427 = vld [vmem:[#allocation8 + $0x1c] sm:$0xf]
    %v428 = vld [vmem:[#allocation8 + $0x20] sm:$0xf]
    %v429 = vld [vmem:[#allocation8 + $0x24] sm:$0xf]
    %v430 = vld [vmem:[#allocation8 + $0x28] sm:$0xf]
    %v431 = vld [vmem:[#allocation8 + $0x2c] sm:$0xf]
    %v432 = vld [vmem:[#allocation8 + $0x30] sm:$0xf]
    %v433 = vld [vmem:[#allocation8 + $0x34] sm:$0xf]
    %v434 = vld [vmem:[#allocation8 + $0x38] sm:$0xf]
    %v435 = vld [vmem:[#allocation8 + $0x3c] sm:$0xf]
    %v436 = vld [vmem:[#allocation8 + $0x40] sm:$0xf]
    %v437 = vld [vmem:[#allocation8 + $0x44] sm:$0xf]
    %v438 = vld [vmem:[#allocation8 + $0x48] sm:$0xf]
    %v439 = vld [vmem:[#allocation8 + $0x4c] sm:$0xf]
    %v440 = vld [vmem:[#allocation8 + $0x50] sm:$0xf]
    %v441 = vld [vmem:[#allocation8 + $0x54] sm:$0xf]
    %v442 = vld [vmem:[#allocation8 + $0x58] sm:$0xf]
    %v443 = vld [vmem:[#allocation8 + $0x5c] sm:$0xf]
    %v444 = vld [vmem:[#allocation8 + $0x60] sm:$0xf]
    %v445 = vld [vmem:[#allocation8 + $0x64] sm:$0xf]
    %v446 = vld [vmem:[#allocation8 + $0x68] sm:$0xf]
    %v447 = vld [vmem:[#allocation8 + $0x6c] sm:$0xf]
    %v448 = vld [vmem:[#allocation8 + $0x70] sm:$0xf]
    %v449 = vld [vmem:[#allocation8 + $0x74] sm:$0xf]
    %v450 = vld [vmem:[#allocation8 + $0x78] sm:$0xf]
    %v451 = vld [vmem:[#allocation8 + $0x7c] sm:$0xf]
    %v452 = vld [vmem:[%s6] sm:$0x1]
    %v454 = vlaneseq
    %v455 = vshrl.u32 %v454, 7
    %v456 = vsub.s32 0, %v455
    %v457 = vrot.slane %v452, %v456
    %v491 = vunpack.c.l.b16 %v420
    %v492 = vunpack.c.l.b16 %v421
    %v493 = vunpack.c.l.b16 %v422
    %v494 = vunpack.c.l.b16 %v423
    %v495 = vunpack.c.l.b16 %v424
    %v496 = vunpack.c.l.b16 %v425
    %v497 = vunpack.c.l.b16 %v426
    %v498 = vunpack.c.l.b16 %v427
    %v499 = vunpack.c.l.b16 %v428
    %v500 = vunpack.c.l.b16 %v429
    %v501 = vunpack.c.l.b16 %v430
    %v502 = vunpack.c.l.b16 %v431
    %v503 = vunpack.c.l.b16 %v432
    %v504 = vunpack.c.l.b16 %v433
    %v505 = vunpack.c.l.b16 %v434
    %v506 = vunpack.c.l.b16 %v435
    %v507 = vunpack.c.l.b16 %v436
    %v508 = vunpack.c.l.b16 %v437
    %v509 = vunpack.c.l.b16 %v438
    %v510 = vunpack.c.l.b16 %v439
    %v511 = vunpack.c.l.b16 %v440
    %v512 = vunpack.c.l.b16 %v441
    %v513 = vunpack.c.l.b16 %v442
    %v514 = vunpack.c.l.b16 %v443
    %v515 = vunpack.c.l.b16 %v444
    %v516 = vunpack.c.l.b16 %v445
    %v517 = vunpack.c.l.b16 %v446
    %v518 = vunpack.c.l.b16 %v447
    %v519 = vunpack.c.l.b16 %v448
    %v520 = vunpack.c.l.b16 %v449
    %v521 = vunpack.c.l.b16 %v450
    %v522 = vunpack.c.l.b16 %v451
    %v523 = vpack.c.b16 %v492, %v491
    %v524 = vpack.c.b16 %v494, %v493
    %v525 = vpack.c.b16 %v496, %v495
    %v526 = vpack.c.b16 %v498, %v497
    %v527 = vpack.c.b16 %v500, %v499
    %v528 = vpack.c.b16 %v502, %v501
    %v529 = vpack.c.b16 %v504, %v503
    %v530 = vpack.c.b16 %v506, %v505
    %v531 = vpack.c.b16 %v508, %v507
    %v532 = vpack.c.b16 %v510, %v509
    %v533 = vpack.c.b16 %v512, %v511
    %v534 = vpack.c.b16 %v514, %v513
    %v535 = vpack.c.b16 %v516, %v515
    %v536 = vpack.c.b16 %v518, %v517
    %v537 = vpack.c.b16 %v520, %v519
    %v538 = vpack.c.b16 %v522, %v521
    %555 = vmatprep.subr.bf16.mxu0 0
    %556 = vmatpush1.bf16.msra.mxu0 %v523
    %557 = vmatprep.subr.bf16.mxu0 0
    %558 = vmatpush1.bf16.msra.mxu0 %v524
    %559 = vmatprep.subr.bf16.mxu0 0
    %560 = vmatpush1.bf16.msra.mxu0 %v525
    %561 = vmatprep.subr.bf16.mxu0 0
    %562 = vmatpush1.bf16.msra.mxu0 %v526
    %563 = vmatprep.subr.bf16.mxu0 0
    %564 = vmatpush1.bf16.msra.mxu0 %v527
    %565 = vmatprep.subr.bf16.mxu0 0
    %566 = vmatpush1.bf16.msra.mxu0 %v528
    %567 = vmatprep.subr.bf16.mxu0 0
    %568 = vmatpush1.bf16.msra.mxu0 %v529
    %569 = vmatprep.subr.bf16.mxu0 0
    %570 = vmatpush1.bf16.msra.mxu0 %v530
    %571 = vmatprep.subr.bf16.mxu0 0
    %572 = vmatpush1.bf16.msra.mxu0 %v531
    %573 = vmatprep.subr.bf16.mxu0 0
    %574 = vmatpush1.bf16.msra.mxu0 %v532
    %575 = vmatprep.subr.bf16.mxu0 0
    %576 = vmatpush1.bf16.msra.mxu0 %v533
    %577 = vmatprep.subr.bf16.mxu0 0
    %578 = vmatpush1.bf16.msra.mxu0 %v534
    %579 = vmatprep.subr.bf16.mxu0 0
    %580 = vmatpush1.bf16.msra.mxu0 %v535
    %581 = vmatprep.subr.bf16.mxu0 0
    %582 = vmatpush1.bf16.msra.mxu0 %v536
    %583 = vmatprep.subr.bf16.mxu0 0
    %584 = vmatpush1.bf16.msra.mxu0 %v537
    %585 = vmatprep.subr.bf16.mxu0 0
    %586 = vmatpush1.bf16.msra.mxu0 %v538
    %587 = vmatprep.mubr.bf16.mxu0 %v419
    %588 = vmatmul.mubr.bf16.gmra.mrb[0].mxu0 %v418
    %v589 = vpop.f32.mrb[0].mxu0
    %v590 = vadd.f32 %v457, %v589
    %v591 = vpop.f32.mrb[0].mxu0
    %v592 = vpop.f32.mrb[0].mxu0
    %v593 = vadd.f32 %v457, %v592
    %v594 = vpop.f32.mrb[0].mxu0
    %595 = vdwg.mxu0
    %v596 = vlaneseq
    %v597 = vand.u32 %v596, 127
    %vm598 = vcmp.lt.s32.totalorder %v597, 4
    %v599 = vsel %vm598, %v590, -inf
    %v600 = vsel %vm598, %v593, -inf
    %601 = vmax.xlane.f32.xlu0 %v599
    %v602 = vpop.xlane.xlu0 %601
    %603 = vmax.xlane.f32.xlu0 %v600
    %v604 = vpop.xlane.xlu0 %603
    %v605 = vsub.f32 %v599, %v602
    %v606 = vsub.f32 %v600, %v604
    %v607 = vmul.f32 %v605, 1.442695
    %v608 = vpow.pop %v607
    %v609 = vmul.f32 %v606, 1.442695
    %v610 = vpow.pop %v609
    %611 = vadd.xlane.f32.xlu0 %v608
    %v612 = vpop.xlane.xlu0 %611
    %613 = vadd.xlane.f32.xlu0 %v610
    %v614 = vpop.xlane.xlu0 %613
    %v615 = vrcp.pop %v612
    %v616 = vmul.f32 %v608, %v615
    %v617 = vrcp.pop %v614
    %v618 = vmul.f32 %v610, %v617
    %v619 = vsel %vm598, %v616, %v590
    %v620 = vsel %vm598, %v618, %v593
    %621 = vst [vmem:[#allocation10] sm:$0xff] %v619
    %622 = vst [vmem:[#allocation10 + $0x8] sm:$0xff] %v620
    // Predicated region
    $region46: #{tpu_custom_call.1} parent=1 // pred_check
      _
    $region47: #{tpu_custom_call.1} parent=1 // pred_check_branch
      %624 = sbr.rel (0) target = $region49
    $region48: #{tpu_custom_call.1} parent=1 // pred_region
      %s626 = ssub.s32 256, 256
      %627 = vsyncadd [#allocation4], %s626
      %s628 = sshll.u32 [#allocation10], 4
      %s629 = int_to_ptr.vmem [resolvable:$true] %s628
      %634 = dma.vmem_to_hbm [thread:$0]  %s629, 256, %s7, [#allocation4], 128, 128, 8
    $region49: #{tpu_custom_call.1} parent=1 // pred_fallthru
      _
    // Predicated region
    $region50: #{tpu_custom_call.1} parent=1 // pred_check
      _
    $region51: #{tpu_custom_call.1} parent=1 // pred_check_branch
      %636 = sbr.rel (0) target = $region53
    $region52: #{tpu_custom_call.1} parent=1 // pred_region
      %637 = dma.done [#allocation4], 256
    $region53: #{tpu_custom_call.1} parent=1 // pred_fallthru
      _
    %638 = vsyncpa [#allocation3], 1
    %639 = vsyncpa [#allocation6], 1
    %640 = vsyncpa [#allocation9], 1
    %641 = vsyncpa [#allocation4], 1

</llo_original>
